<compile_context>
chip_gen: v5e
topology: v5e:2x2
jax: 0.10.0
libtpu: 0.0.40
codegen_flags: <defaults>
</compile_context>

<pallas_src>
import math
import jax
import jax.numpy as jnp
from jax import lax
from jax.experimental import pallas as pl
from jax.experimental.pallas import tpu as pltpu


def _round_up(x, m):
    return ((x + m - 1) // m) * m


def _cdiv(a, b):
    return -(-a // b)


def _vmem_capacity_bytes():
    try:
        return int(pltpu.get_tpu_info().vmem_capacity_bytes)
    except Exception:
        return 64 << 20  # conservative (v7x per-TC size); safe on all generations


# ---------------------------------------------------------------------------
# Kernels
# ---------------------------------------------------------------------------

def _make_resident_kernel(normalized):
    """Whole MLP per row tile; W1/W2 fully resident in VMEM."""
    def kernel(x_ref, w1_ref, b1_ref, w2_ref, b2_ref, o_ref):
        x = x_ref[...]                                       # native dtype -> MXU
        h = jnp.dot(x, w1_ref[...], preferred_element_type=jnp.float32)
        h = jnp.maximum(h + b1_ref[...].astype(jnp.float32), 0.0)
        # Feed the MXU a native-precision LHS (avoid the multi-pass f32 path).
        h = h.astype(w2_ref.dtype)
        out = jnp.dot(h, w2_ref[...], preferred_element_type=jnp.float32)
        out = out + b2_ref[...].astype(jnp.float32)
        if normalized:
            ssq = jnp.sum(out * out, axis=-1, keepdims=True)
            out = out * lax.rsqrt(ssq)                        # EUP slot
            out = jnp.where(jnp.isfinite(out), out, 0.0)      # nan/inf -> 0
        o_ref[...] = out.astype(o_ref.dtype)
    return kernel


def _make_ktiled_kernel(normalized):
    """Hidden-dim tiled MLP: each k step computes relu(x@W1[:,k] + b1[k]) and
    accumulates its contribution h_k @ W2[k,:] into a VMEM f32 accumulator."""
    def kernel(x_ref, w1_ref, b1_ref, w2_ref, b2_ref, o_ref, acc_ref):
        k = pl.program_id(1)

        @pl.when(k == 0)
        def _():
            acc_ref[...] = jnp.zeros_like(acc_ref)

        h = jnp.dot(x_ref[...], w1_ref[...], preferred_element_type=jnp.float32)
        h = jnp.maximum(h + b1_ref[...].astype(jnp.float32), 0.0)
        h = h.astype(w2_ref.dtype)
        acc_ref[...] += jnp.dot(h, w2_ref[...], preferred_element_type=jnp.float32)

        @pl.when(k == pl.num_programs(1) - 1)
        def _():
            out = acc_ref[...] + b2_ref[...].astype(jnp.float32)
            if normalized:
                ssq = jnp.sum(out * out, axis=-1, keepdims=True)
                out = out * lax.rsqrt(ssq)
                out = jnp.where(jnp.isfinite(out), out, 0.0)
            o_ref[...] = out.astype(o_ref.dtype)
    return kernel


# ---------------------------------------------------------------------------
# pallas_call wrappers
# ---------------------------------------------------------------------------

def _resident_forward(x2d, w1p, b1p, w2p, b2p, *, normalized, tm, grid_rows,
                      vmem_limit, big_vmem, out_dtype):
    N, in_dim = x2d.shape
    mid_p = w1p.shape[1]
    out_dim = w2p.shape[1]
    kernel = _make_resident_kernel(bool(normalized))

    def call(fancy):
        def spec(shape, index_map, *, const=False, stream=False):
            kw = {}
            if fancy and const:
                kw["pipeline_mode"] = pl.Buffered(1)      # constant block index
            elif fancy and stream and big_vmem:
                kw["pipeline_mode"] = pl.Buffered(3)      # deeper stream on 128MiB chips
            return pl.BlockSpec(shape, index_map, **kw)

        return pl.pallas_call(
            kernel,
            out_shape=jax.ShapeDtypeStruct((N, out_dim), out_dtype),
            grid_spec=pltpu.PrefetchScalarGridSpec(
                num_scalar_prefetch=0,
                grid=(grid_rows,),
                in_specs=[
                    spec((tm, in_dim), lambda i: (i, 0), stream=True),   # x rows
                    spec((in_dim, mid_p), lambda i: (0, 0), const=True),  # W1
                    spec((1, mid_p), lambda i: (0, 0), const=True),       # b1
                    spec((mid_p, out_dim), lambda i: (0, 0), const=True), # W2
                    spec((1, out_dim), lambda i: (0, 0), const=True),     # b2
                ],
                out_specs=pl.BlockSpec((tm, out_dim), lambda i: (i, 0)),
            ),
            compiler_params=pltpu.CompilerParams(
                dimension_semantics=("parallel",),
                vmem_limit_bytes=vmem_limit,
            ),
        )(x2d, w1p, b1p, w2p, b2p)

    try:
        return call(True)
    except Exception:
        # Older jax without BlockSpec pipeline_mode support -> plain specs.
        return call(False)


def _ktiled_forward(x2d, w1p, b1p, w2p, b2p, *, normalized, tm, grid_rows, tk,
                    vmem_limit, out_dtype):
    N, in_dim = x2d.shape
    mid_p = w1p.shape[1]
    out_dim = w2p.shape[1]
    n_k = mid_p // tk
    kernel = _make_ktiled_kernel(bool(normalized))

    return pl.pallas_call(
        kernel,
        out_shape=jax.ShapeDtypeStruct((N, out_dim), out_dtype),
        grid_spec=pltpu.PrefetchScalarGridSpec(
            num_scalar_prefetch=0,
            grid=(grid_rows, n_k),
            in_specs=[
                pl.BlockSpec((tm, in_dim), lambda i, k: (i, 0)),     # x rows
                pl.BlockSpec((in_dim, tk), lambda i, k: (0, k)),     # W1 col block
                pl.BlockSpec((1, tk), lambda i, k: (0, k)),          # b1 block
                pl.BlockSpec((tk, out_dim), lambda i, k: (k, 0)),    # W2 row block
                pl.BlockSpec((1, out_dim), lambda i, k: (0, 0)),     # b2
            ],
            out_specs=pl.BlockSpec((tm, out_dim), lambda i, k: (i, 0)),
            scratch_shapes=[pltpu.VMEM((tm, out_dim), jnp.float32)],
        ),
        compiler_params=pltpu.CompilerParams(
            dimension_semantics=("parallel", "arbitrary"),
            vmem_limit_bytes=vmem_limit,
        ),
    )(x2d, w1p, b1p, w2p, b2p)


# ---------------------------------------------------------------------------
# Public API
# ---------------------------------------------------------------------------

def prepare_prediction_inception_params(w1, b1, w2, b2, dtype=None):
    """Pad the hidden (middle) dim to a multiple of 128 ONCE at init and
    optionally cast to a compute dtype (e.g. bf16).  in_dim / out_dim are left
    unpadded (the kernel uses full-dim blocks for those axes)."""
    in_dim, middle_dim = w1.shape
    out_dim = w2.shape[1]
    mid_p = _round_up(middle_dim, 128)
    if dtype is None:
        dtype = w1.dtype
    w1p = jnp.zeros((in_dim, mid_p), dtype).at[:, :middle_dim].set(w1.astype(dtype))
    b1p = jnp.zeros((1, mid_p), dtype).at[0, :middle_dim].set(b1.astype(dtype))
    w2p = jnp.zeros((mid_p, out_dim), dtype).at[:middle_dim, :].set(w2.astype(dtype))
    b2p = b2.astype(dtype).reshape(1, out_dim)
    return w1p, b1p, w2p, b2p


def prediction_inception_forward(x, w1p, b1p, w2p, b2p, *, normalized=1,
                                 row_tile=None, force_k_blocks=None):
    """x: (B, T, in_dim); padded params from prepare_prediction_inception_params.
    Returns (B, T, out_dim) in x.dtype."""
    B, T, in_dim = x.shape
    mid_p = w1p.shape[1]
    out_dim = w2p.shape[1]
    assert w1p.shape[0] == in_dim and w2p.shape[0] == mid_p and mid_p % 128 == 0

    N = B * T
    x2d = x.reshape(N, in_dim)
    out_dtype = x.dtype

    vmem_cap = _vmem_capacity_bytes()
    big_vmem = vmem_cap >= (100 << 20)          # v5e/v6e (128 MiB) vs v7x (64 MiB)
    if row_tile is None:
        row_tile = 1024 if big_vmem else 512
    row_tile = max(8, _round_up(int(row_tile), 8))

    # Row tile: large enough to amortize per-step overhead, small enough that
    # there are >= 4 grid steps so the "parallel" axis shards across v7x's 2 TCs.
    tm_core_cap = _round_up(max(1, _cdiv(N, 4)), 8)
    tm = max(8, min(row_tile, tm_core_cap))
    grid_rows = _cdiv(N, tm)

    x_b = x2d.dtype.itemsize
    w_b = w1p.dtype.itemsize

    weight_bytes = (in_dim * mid_p + mid_p * out_dim + mid_p + out_dim) * w_b
    stream_bytes = 3 * tm * in_dim * x_b + 2 * tm * out_dim * x_b
    interm_bytes = tm * mid_p * (4 + w_b) + tm * out_dim * 4
    resident_need = stream_bytes + 2 * weight_bytes + interm_bytes
    budget = int(0.80 * vmem_cap)

    forced = force_k_blocks is not None and int(force_k_blocks) > 1

    if (not forced) and resident_need <= budget:
        vmem_limit = int(min(int(0.9 * vmem_cap),
                             max(32 << 20, resident_need + (2 << 20))))
        out2d = _resident_forward(
            x2d, w1p, b1p, w2p, b2p, normalized=normalized, tm=tm,
            grid_rows=grid_rows, vmem_limit=vmem_limit, big_vmem=big_vmem,
            out_dtype=out_dtype)
    else:
        # K-tiled path: tile the hidden dim; tk must be a multiple of 128 that
        # divides mid_p (mid_p was padded to 128 at init, so such a tk exists).
        n128 = mid_p // 128
        if forced:
            n_k = int(force_k_blocks)
            if n128 % n_k != 0:
                raise ValueError("force_k_blocks must divide mid_p // 128")
            tk = mid_p // n_k
        else:
            tk = 128
            for cand_nk in range(1, n128 + 1):
                if n128 % cand_nk:
                    continue
                cand_tk = mid_p // cand_nk
                step_w = 2 * (in_dim * cand_tk + cand_tk * out_dim
                              + cand_tk + out_dim) * w_b
                need = stream_bytes + step_w + tm * cand_tk * (4 + w_b) \
                    + 2 * tm * out_dim * 4
                if need <= budget:
                    tk = cand_tk
                    break
            # TODO(synk): if even tk=128 exceeds the VMEM budget (huge in_dim or
            # out_dim), an additional tiling of the in/out axes would be needed.
        step_w = 2 * (in_dim * tk + tk * out_dim + tk + out_dim) * w_b
        ktiled_need = stream_bytes + step_w + tm * tk * (4 + w_b) \
            + 2 * tm * out_dim * 4
        vmem_limit = int(min(int(0.9 * vmem_cap),
                             max(32 << 20, ktiled_need + (2 << 20))))
        out2d = _ktiled_forward(
            x2d, w1p, b1p, w2p, b2p, normalized=normalized, tm=tm,
            grid_rows=grid_rows, tk=tk, vmem_limit=vmem_limit,
            out_dtype=out_dtype)

    return out2d.reshape(B, T, out_dim)


# ---------------------------------------------------------------------------
# Reference + demo
# ---------------------------------------------------------------------------

def xavier_uniform(key, fan_in, fan_out, dtype=jnp.float32):
    # matches nn.init.xavier_uniform_ bound; weight stored as (fan_in, fan_out)
    bound = math.sqrt(6.0 / (fan_in + fan_out))
    return jax.random.uniform(key, (fan_in, fan_out), dtype=dtype,
                              minval=-bound, maxval=bound)


def reference_forward(x, w1, b1, w2, b2, normalized=1):
    B, T, in_dim = x.shape
    x2d = x.reshape(-1, in_dim)
    h = jnp.maximum(x2d @ w1 + b1, 0.0)
    out = h @ w2 + b2
    if normalized == 1:
        norm = jnp.sqrt(jnp.sum(out * out, axis=1, keepdims=True))
        out = out / norm
        out = jnp.where(jnp.isnan(out), 0.0, out)
        out = jnp.where(jnp.isinf(out), 0.0, out)
    return out.reshape(B, T, -1)


if __name__ == "__main__":
    # Small shapes consistent with the module: input (B, T, in_dim)
    B, T = 2, 8
    in_dim, middle_dim, out_dim = 32, 64, 16

    key = jax.random.PRNGKey(0)
    kx, k1, k2 = jax.random.split(key, 3)

    x = jax.random.normal(kx, (B, T, in_dim), dtype=jnp.float32)
    w1 = xavier_uniform(k1, in_dim, middle_dim)
    b1 = jnp.zeros((middle_dim,), jnp.float32)       # nn.init.constant_(bias, 0)
    w2 = xavier_uniform(k2, middle_dim, out_dim)
    b2 = jnp.zeros((out_dim,), jnp.float32)

    # Pad once at init (hoisted out of the forward path).
    params_f32 = prepare_prediction_inception_params(w1, b1, w2, b2)

    # --- f32, normalized path (resident weights) ---
    out = jax.block_until_ready(
        prediction_inception_forward(x, *params_f32, normalized=1))
    ref = reference_forward(x, w1, b1, w2, b2, normalized=1)
    assert out.shape == (B, T, out_dim)
    assert jnp.allclose(out, ref, atol=1e-5, rtol=1e-5), "mismatch (norm path)"

    # --- f32, non-normalized path ---
    out_nn = jax.block_until_ready(
        prediction_inception_forward(x, *params_f32, normalized=0))
    ref_nn = reference_forward(x, w1, b1, w2, b2, normalized=0)
    assert jnp.allclose(out_nn, ref_nn, atol=1e-5, rtol=1e-5), "mismatch (no-norm)"

    # --- bf16 fast path: bf16 storage/MXU inputs, f32 accumulate + normalize ---
    params_bf16 = prepare_prediction_inception_params(w1, b1, w2, b2,
                                                      dtype=jnp.bfloat16)
    x_bf = x.astype(jnp.bfloat16)
    out_bf = jax.block_until_ready(
        prediction_inception_forward(x_bf, *params_bf16, normalized=1))
    ref_bf = reference_forward(
        x_bf.astype(jnp.float32),
        w1.astype(jnp.bfloat16).astype(jnp.float32), b1,
        w2.astype(jnp.bfloat16).astype(jnp.float32), b2, normalized=1)
    assert out_bf.dtype == jnp.bfloat16
    assert jnp.allclose(out_bf.astype(jnp.float32), ref_bf,
                        atol=2.5e-2, rtol=2.5e-2), "mismatch (bf16 path)"

    # --- K-tiled fallback path (forced), for weights that don't fit resident ---
    middle_big = 256
    k3, k4 = jax.random.split(jax.random.PRNGKey(1))
    w1b = xavier_uniform(k3, in_dim, middle_big)
    b1b = jnp.zeros((middle_big,), jnp.float32)
    w2b = xavier_uniform(k4, middle_big, out_dim)
    b2b = jnp.zeros((out_dim,), jnp.float32)
    params_big = prepare_prediction_inception_params(w1b, b1b, w2b, b2b)
    out_k = jax.block_until_ready(
        prediction_inception_forward(x, *params_big, normalized=1,
                                     force_k_blocks=2))
    ref_k = reference_forward(x, w1b, b1b, w2b, b2b, normalized=1)
    assert jnp.allclose(out_k, ref_k, atol=1e-5, rtol=1e-5), "mismatch (k-tiled)"

    print("KERNEL_OK")
</pallas_src>

<mosaic_0001>
module attributes {stable_mosaic.version = 11 : i64} {
  func.func @kernel(%arg0: i32, %arg1: memref<8x32xf32, #tpu.memory_space<vmem>>, %arg2: memref<32x128xf32, #tpu.memory_space<vmem>>, %arg3: memref<1x128xf32, #tpu.memory_space<vmem>>, %arg4: memref<128x16xf32, #tpu.memory_space<vmem>>, %arg5: memref<1x16xf32, #tpu.memory_space<vmem>>, %arg6: memref<8x16xf32, #tpu.memory_space<vmem>>) attributes {dimension_semantics = [#tpu.dimension_semantics<parallel>], iteration_bounds = array<i64: 2>, scalar_prefetch = 0 : i64, scratch_operands = 0 : i64, tpu.core_type = #tpu.core_type<tc>, window_params = [{transform_indices = @transform_0, window_bounds = array<i64: 8, 32>}, {pipeline_mode = #tpu.pipeline_mode<synchronous>, transform_indices = @transform_1, window_bounds = array<i64: 32, 128>}, {pipeline_mode = #tpu.pipeline_mode<synchronous>, transform_indices = @transform_2, window_bounds = array<i64: 1, 128>}, {pipeline_mode = #tpu.pipeline_mode<synchronous>, transform_indices = @transform_3, window_bounds = array<i64: 128, 16>}, {pipeline_mode = #tpu.pipeline_mode<synchronous>, transform_indices = @transform_4, window_bounds = array<i64: 1, 16>}, {transform_indices = @transform_5, window_bounds = array<i64: 8, 16>}]} {
    %c0 = arith.constant 0 : index
    %c0_0 = arith.constant 0 : index
    %0 = vector.load %arg1[%c0, %c0_0] : memref<8x32xf32, #tpu.memory_space<vmem>>, vector<8x32xf32>
    %c0_1 = arith.constant 0 : index
    %c0_2 = arith.constant 0 : index
    %1 = vector.load %arg2[%c0_1, %c0_2] : memref<32x128xf32, #tpu.memory_space<vmem>>, vector<32x128xf32>
    %cst = arith.constant dense<0.000000e+00> : vector<8x128xf32>
    %2 = tpu.matmul %0, %1, %cst {dimension_numbers = #tpu.dot_dimension_numbers<[1], [0], [0], [1], [0, 0, 1, 1], [], []>} : vector<8x32xf32>, vector<32x128xf32>, vector<8x128xf32> -> vector<8x128xf32>
    %c0_3 = arith.constant 0 : index
    %c0_4 = arith.constant 0 : index
    %3 = vector.load %arg3[%c0_3, %c0_4] : memref<1x128xf32, #tpu.memory_space<vmem>>, vector<1x128xf32>
    %4 = vector.broadcast %3 : vector<1x128xf32> to vector<8x128xf32>
    %5 = arith.addf %2, %4 : vector<8x128xf32>
    %cst_5 = arith.constant 0.000000e+00 : f32
    %6 = vector.broadcast %cst_5 : f32 to vector<8x128xf32>
    %7 = arith.maximumf %5, %6 : vector<8x128xf32>
    %c0_6 = arith.constant 0 : index
    %c0_7 = arith.constant 0 : index
    %8 = vector.load %arg4[%c0_6, %c0_7] : memref<128x16xf32, #tpu.memory_space<vmem>>, vector<128x16xf32>
    %cst_8 = arith.constant dense<0.000000e+00> : vector<8x16xf32>
    %9 = tpu.matmul %7, %8, %cst_8 {dimension_numbers = #tpu.dot_dimension_numbers<[1], [0], [0], [1], [0, 0, 1, 1], [], []>} : vector<8x128xf32>, vector<128x16xf32>, vector<8x16xf32> -> vector<8x16xf32>
    %c0_9 = arith.constant 0 : index
    %c0_10 = arith.constant 0 : index
    %10 = vector.load %arg5[%c0_9, %c0_10] : memref<1x16xf32, #tpu.memory_space<vmem>>, vector<1x16xf32>
    %11 = vector.broadcast %10 : vector<1x16xf32> to vector<8x16xf32>
    %12 = arith.addf %9, %11 : vector<8x16xf32>
    %13 = arith.mulf %12, %12 : vector<8x16xf32>
    %cst_11 = arith.constant dense<0.000000e+00> : vector<8xf32>
    %14 = vector.multi_reduction <add>, %13, %cst_11 [1] : vector<8x16xf32> to vector<8xf32>
    %15 = vector.shape_cast %14 : vector<8xf32> to vector<8x1xf32>
    %16 = math.rsqrt %15 : vector<8x1xf32>
    %17 = vector.broadcast %16 : vector<8x1xf32> to vector<8x16xf32>
    %18 = arith.mulf %12, %17 : vector<8x16xf32>
    %19 = tpu.weird %18 : vector<8x16xf32> -> vector<8x16xi1>
    %cst_12 = arith.constant dense<true> : vector<8x16xi1>
    %20 = arith.xori %19, %cst_12 : vector<8x16xi1>
    %cst_13 = arith.constant 0.000000e+00 : f32
    %21 = vector.broadcast %cst_13 : f32 to vector<8x16xf32>
    %22 = arith.select %20, %18, %21 : vector<8x16xi1>, vector<8x16xf32>
    %c0_14 = arith.constant 0 : index
    %c0_15 = arith.constant 0 : index
    %23 = vector.load %arg6[%c0_14, %c0_15] : memref<8x16xf32, #tpu.memory_space<vmem>>, vector<8x16xf32>
    tpu.vector_store %arg6[%c0_14, %c0_15], %22 {strides = array<i32>} : memref<8x16xf32, #tpu.memory_space<vmem>>, vector<8x16xf32>,
    return
  }
  func.func @transform_0(%arg0: i32) -> (i32, i32) {
    %c0_i32 = arith.constant 0 : i32
    %c0_i32_0 = arith.constant 0 : i32
    return %arg0, %c0_i32 : i32, i32
  }
  func.func @transform_1(%arg0: i32) -> (i32, i32) {
    %c0_i32 = arith.constant 0 : i32
    %c0_i32_0 = arith.constant 0 : i32
    %c0_i32_1 = arith.constant 0 : i32
    return %c0_i32, %c0_i32_0 : i32, i32
  }
  func.func @transform_2(%arg0: i32) -> (i32, i32) {
    %c0_i32 = arith.constant 0 : i32
    %c0_i32_0 = arith.constant 0 : i32
    %c0_i32_1 = arith.constant 0 : i32
    return %c0_i32, %c0_i32_0 : i32, i32
  }
  func.func @transform_3(%arg0: i32) -> (i32, i32) {
    %c0_i32 = arith.constant 0 : i32
    %c0_i32_0 = arith.constant 0 : i32
    %c0_i32_1 = arith.constant 0 : i32
    return %c0_i32, %c0_i32_0 : i32, i32
  }
  func.func @transform_4(%arg0: i32) -> (i32, i32) {
    %c0_i32 = arith.constant 0 : i32
    %c0_i32_0 = arith.constant 0 : i32
    %c0_i32_1 = arith.constant 0 : i32
    return %c0_i32, %c0_i32_0 : i32, i32
  }
  func.func @transform_5(%arg0: i32) -> (i32, i32) {
    %c0_i32 = arith.constant 0 : i32
    %c0_i32_0 = arith.constant 0 : i32
    return %arg0, %c0_i32 : i32, i32
  }
}

module attributes {stable_mosaic.version = 11 : i64} {
  func.func @kernel(%arg0: i32, %arg1: memref<8x32xf32, #tpu.memory_space<vmem>>, %arg2: memref<32x128xf32, #tpu.memory_space<vmem>>, %arg3: memref<1x128xf32, #tpu.memory_space<vmem>>, %arg4: memref<128x16xf32, #tpu.memory_space<vmem>>, %arg5: memref<1x16xf32, #tpu.memory_space<vmem>>, %arg6: memref<8x16xf32, #tpu.memory_space<vmem>>) attributes {dimension_semantics = [#tpu.dimension_semantics<parallel>], iteration_bounds = array<i64: 2>, scalar_prefetch = 0 : i64, scratch_operands = 0 : i64, tpu.core_type = #tpu.core_type<tc>, window_params = [{transform_indices = @transform_0, window_bounds = array<i64: 8, 32>}, {pipeline_mode = #tpu.pipeline_mode<synchronous>, transform_indices = @transform_1, window_bounds = array<i64: 32, 128>}, {pipeline_mode = #tpu.pipeline_mode<synchronous>, transform_indices = @transform_2, window_bounds = array<i64: 1, 128>}, {pipeline_mode = #tpu.pipeline_mode<synchronous>, transform_indices = @transform_3, window_bounds = array<i64: 128, 16>}, {pipeline_mode = #tpu.pipeline_mode<synchronous>, transform_indices = @transform_4, window_bounds = array<i64: 1, 16>}, {transform_indices = @transform_5, window_bounds = array<i64: 8, 16>}]} {
    %c0 = arith.constant 0 : index
    %c0_0 = arith.constant 0 : index
    %0 = vector.load %arg1[%c0, %c0_0] : memref<8x32xf32, #tpu.memory_space<vmem>>, vector<8x32xf32>
    %c0_1 = arith.constant 0 : index
    %c0_2 = arith.constant 0 : index
    %1 = vector.load %arg2[%c0_1, %c0_2] : memref<32x128xf32, #tpu.memory_space<vmem>>, vector<32x128xf32>
    %cst = arith.constant dense<0.000000e+00> : vector<8x128xf32>
    %2 = tpu.matmul %0, %1, %cst {dimension_numbers = #tpu.dot_dimension_numbers<[1], [0], [0], [1], [0, 0, 1, 1], [], []>} : vector<8x32xf32>, vector<32x128xf32>, vector<8x128xf32> -> vector<8x128xf32>
    %c0_3 = arith.constant 0 : index
    %c0_4 = arith.constant 0 : index
    %3 = vector.load %arg3[%c0_3, %c0_4] : memref<1x128xf32, #tpu.memory_space<vmem>>, vector<1x128xf32>
    %4 = vector.broadcast %3 : vector<1x128xf32> to vector<8x128xf32>
    %5 = arith.addf %2, %4 : vector<8x128xf32>
    %cst_5 = arith.constant 0.000000e+00 : f32
    %6 = vector.broadcast %cst_5 : f32 to vector<8x128xf32>
    %7 = arith.maximumf %5, %6 : vector<8x128xf32>
    %c0_6 = arith.constant 0 : index
    %c0_7 = arith.constant 0 : index
    %8 = vector.load %arg4[%c0_6, %c0_7] : memref<128x16xf32, #tpu.memory_space<vmem>>, vector<128x16xf32>
    %cst_8 = arith.constant dense<0.000000e+00> : vector<8x16xf32>
    %9 = tpu.matmul %7, %8, %cst_8 {dimension_numbers = #tpu.dot_dimension_numbers<[1], [0], [0], [1], [0, 0, 1, 1], [], []>} : vector<8x128xf32>, vector<128x16xf32>, vector<8x16xf32> -> vector<8x16xf32>
    %c0_9 = arith.constant 0 : index
    %c0_10 = arith.constant 0 : index
    %10 = vector.load %arg5[%c0_9, %c0_10] : memref<1x16xf32, #tpu.memory_space<vmem>>, vector<1x16xf32>
    %11 = vector.broadcast %10 : vector<1x16xf32> to vector<8x16xf32>
    %12 = arith.addf %9, %11 : vector<8x16xf32>
    %13 = arith.mulf %12, %12 : vector<8x16xf32>
    %cst_11 = arith.constant dense<0.000000e+00> : vector<8xf32>
    %14 = vector.multi_reduction <add>, %13, %cst_11 [1] : vector<8x16xf32> to vector<8xf32>
    %15 = vector.shape_cast %14 : vector<8xf32> to vector<8x1xf32>
    %16 = math.rsqrt %15 : vector<8x1xf32>
    %17 = vector.broadcast %16 : vector<8x1xf32> to vector<8x16xf32>
    %18 = arith.mulf %12, %17 : vector<8x16xf32>
    %19 = tpu.weird %18 : vector<8x16xf32> -> vector<8x16xi1>
    %cst_12 = arith.constant dense<true> : vector<8x16xi1>
    %20 = arith.xori %19, %cst_12 : vector<8x16xi1>
    %cst_13 = arith.constant 0.000000e+00 : f32
    %21 = vector.broadcast %cst_13 : f32 to vector<8x16xf32>
    %22 = arith.select %20, %18, %21 : vector<8x16xi1>, vector<8x16xf32>
    %c0_14 = arith.constant 0 : index
    %c0_15 = arith.constant 0 : index
    %23 = vector.load %arg6[%c0_14, %c0_15] : memref<8x16xf32, #tpu.memory_space<vmem>>, vector<8x16xf32>
    tpu.vector_store %arg6[%c0_14, %c0_15], %22 {strides = array<i32>} : memref<8x16xf32, #tpu.memory_space<vmem>>, vector<8x16xf32>,
    return
  }
  func.func @transform_0(%arg0: i32) -> (i32, i32) {
    %c0_i32 = arith.constant 0 : i32
    %c0_i32_0 = arith.constant 0 : i32
    return %arg0, %c0_i32 : i32, i32
  }
  func.func @transform_1(%arg0: i32) -> (i32, i32) {
    %c0_i32 = arith.constant 0 : i32
    %c0_i32_0 = arith.constant 0 : i32
    %c0_i32_1 = arith.constant 0 : i32
    return %c0_i32, %c0_i32_0 : i32, i32
  }
  func.func @transform_2(%arg0: i32) -> (i32, i32) {
    %c0_i32 = arith.constant 0 : i32
    %c0_i32_0 = arith.constant 0 : i32
    %c0_i32_1 = arith.constant 0 : i32
    return %c0_i32, %c0_i32_0 : i32, i32
  }
  func.func @transform_3(%arg0: i32) -> (i32, i32) {
    %c0_i32 = arith.constant 0 : i32
    %c0_i32_0 = arith.constant 0 : i32
    %c0_i32_1 = arith.constant 0 : i32
    return %c0_i32, %c0_i32_0 : i32, i32
  }
  func.func @transform_4(%arg0: i32) -> (i32, i32) {
    %c0_i32 = arith.constant 0 : i32
    %c0_i32_0 = arith.constant 0 : i32
    %c0_i32_1 = arith.constant 0 : i32
    return %c0_i32, %c0_i32_0 : i32, i32
  }
  func.func @transform_5(%arg0: i32) -> (i32, i32) {
    %c0_i32 = arith.constant 0 : i32
    %c0_i32_0 = arith.constant 0 : i32
    return %arg0, %c0_i32 : i32, i32
  }
}

</mosaic_0001>

<llo_original>
// kernel: tpu_custom_call.1
$region0: #{tpu_custom_call.1}
  #allocation0 [shape = 'u32[]', space=smem, size = 0x4, offset = 0x4, fixed_abs, tag = 'smem constant byte address 0x4 - core index']
  #allocation1 [shape = 'u32[72,128]{1,0:T(1,128)}', space=vmem, size = 0x9000, scoped, tag = 'internal scratch']
  %s0 = inlined_call_operand.vmem [shape: f32[16,32], index: 0, kind: input, shape index: {}]
  %s1 = inlined_call_operand.vmem [shape: f32[32,128], index: 1, kind: input, shape index: {}]
  %s2 = inlined_call_operand.vmem [shape: f32[1,128], index: 2, kind: input, shape index: {}]
  %s3 = inlined_call_operand.vmem [shape: f32[128,16], index: 3, kind: input, shape index: {}]
  %s4 = inlined_call_operand.vmem [shape: f32[1,16], index: 4, kind: input, shape index: {}]
  %s5 = inlined_call_operand.hbm [shape: f32[16,16], index: 5, kind: output, shape index: {}]
  %s6 = sld [smem:[#allocation0]]
  $region53: #{tpu_custom_call.1} parent=0
    _
  %s8 = ssub.s32 1, %s6
  %s9 = scalar_select 0, %s8, %s6
  $region1: #{tpu_custom_call.1} parent=0
    #allocation2 [shape = 'u8[8192]{0}', space=vmem, size = 0x2000, scoped, tag = 'output window, operand 0']
    #allocation3 [shape = 's32[2]{0}', space=sflag, size = 0x8, scoped, tag = 'scoped memory for tpu_custom_call.1']
    %10 = vsyncpa [#allocation3], 0
    %s11 = scalar_lea.sflag [#allocation3], 1
    %12 = vsyncpa %s11, 0
    loop: start=0, step=1, limit=4
    $region2: #{tpu_custom_call.1} parent=1 // loop_pre_header
      _
    $region3: #{tpu_custom_call.1} parent=1 // loop_header
      %s14 = sphi 0, %s18
      %p15 = scmp.ge.s32.totalorder %s14, 4
      %s24 = sphi 0, %s26
      %s27 = sphi 0, %s24
      %s28 = sphi 0, %s27
      %s44 = sphi 0, %s28
      %s48 = sphi 0, %s48
      %s50 = sphi 0, %s48
      %s51 = sphi 0, %s50
      %s65 = sphi 0, %s51
      %s69 = sphi 0, %s69
      %s71 = sphi 0, %s69
      %s72 = sphi 0, %s71
      %s86 = sphi 0, %s72
      %s90 = sphi 0, %s90
      %s92 = sphi 0, %s90
      %s93 = sphi 0, %s92
      %s107 = sphi 0, %s93
      %s111 = sphi 0, %s111
      %s113 = sphi 0, %s111
      %s114 = sphi 0, %s113
      %s128 = sphi 0, %s114
      %s134 = sphi 0, %s136
      %s137 = sphi 0, %s134
      %s138 = sphi 0, %s137
      %s154 = sphi 0, %s138
    $region4: #{tpu_custom_call.1} parent=1 // loop_header_branch
      %17 = sbr.rel (%p15) target = $region8
    $region5: #{tpu_custom_call.1} parent=1 // loop_body
      %s19 = ssub.s32 %s14, 1
      %s20 = ssub.s32 %s14, 2
      %s21 = sadd.s32 %s14, 1
      %s22 = ssub.s32 %s14, %s21
      %p23 = scmp.eq.s32.totalorder %s22, 0
      %s25 = sadd.s32 %s24, 1
      %s26 = scalar_select %p23, %s24, %s25
      %p29 = pneg %p23
      %p30 = scmp.eq.s32.totalorder %s14, 1
      %p31 = por %p29, %p30
      %p32 = scmp.ne.s32.totalorder %s24, %s27
      %p33 = scmp.eq.s32.totalorder %s14, 0
      %p34 = por %p32, %p33
      %p35 = scmp.ne.s32.totalorder %s24, %s27
      %p36 = scmp.eq.s32.totalorder %s19, 1
      %p37 = por %p35, %p36
      %p38 = scmp.ne.s32.totalorder %s27, %s28
      %p39 = scmp.eq.s32.totalorder %s19, 0
      %p40 = por %p38, %p39
      %p41 = scmp.ne.s32.totalorder %s27, %s28
      %p42 = scmp.eq.s32.totalorder %s20, 1
      %p43 = por %p41, %p42
      %p45 = scmp.ne.s32.totalorder %s28, %s44
      %p46 = scmp.eq.s32.totalorder %s20, 0
      %p47 = por %p45, %p46
      %s49 = sadd.s32 %s48, 1
      %p52 = scmp.eq.s32.totalorder %s14, 1
      %p53 = scmp.ne.s32.totalorder %s48, %s50
      %p54 = scmp.eq.s32.totalorder %s14, 0
      %p55 = por %p53, %p54
      %p56 = scmp.ne.s32.totalorder %s48, %s50
      %p57 = scmp.eq.s32.totalorder %s19, 1
      %p58 = por %p56, %p57
      %p59 = scmp.ne.s32.totalorder %s50, %s51
      %p60 = scmp.eq.s32.totalorder %s19, 0
      %p61 = por %p59, %p60
      %p62 = scmp.ne.s32.totalorder %s50, %s51
      %p63 = scmp.eq.s32.totalorder %s20, 1
      %p64 = por %p62, %p63
      %p66 = scmp.ne.s32.totalorder %s51, %s65
      %p67 = scmp.eq.s32.totalorder %s20, 0
      %p68 = por %p66, %p67
      %s70 = sadd.s32 %s69, 1
      %p73 = scmp.eq.s32.totalorder %s14, 1
      %p74 = scmp.ne.s32.totalorder %s69, %s71
      %p75 = scmp.eq.s32.totalorder %s14, 0
      %p76 = por %p74, %p75
      %p77 = scmp.ne.s32.totalorder %s69, %s71
      %p78 = scmp.eq.s32.totalorder %s19, 1
      %p79 = por %p77, %p78
      %p80 = scmp.ne.s32.totalorder %s71, %s72
      %p81 = scmp.eq.s32.totalorder %s19, 0
      %p82 = por %p80, %p81
      %p83 = scmp.ne.s32.totalorder %s71, %s72
      %p84 = scmp.eq.s32.totalorder %s20, 1
      %p85 = por %p83, %p84
      %p87 = scmp.ne.s32.totalorder %s72, %s86
      %p88 = scmp.eq.s32.totalorder %s20, 0
      %p89 = por %p87, %p88
      %s91 = sadd.s32 %s90, 1
      %p94 = scmp.eq.s32.totalorder %s14, 1
      %p95 = scmp.ne.s32.totalorder %s90, %s92
      %p96 = scmp.eq.s32.totalorder %s14, 0
      %p97 = por %p95, %p96
      %p98 = scmp.ne.s32.totalorder %s90, %s92
      %p99 = scmp.eq.s32.totalorder %s19, 1
      %p100 = por %p98, %p99
      %p101 = scmp.ne.s32.totalorder %s92, %s93
      %p102 = scmp.eq.s32.totalorder %s19, 0
      %p103 = por %p101, %p102
      %p104 = scmp.ne.s32.totalorder %s92, %s93
      %p105 = scmp.eq.s32.totalorder %s20, 1
      %p106 = por %p104, %p105
      %p108 = scmp.ne.s32.totalorder %s93, %s107
      %p109 = scmp.eq.s32.totalorder %s20, 0
      %p110 = por %p108, %p109
      %s112 = sadd.s32 %s111, 1
      %p115 = scmp.eq.s32.totalorder %s14, 1
      %p116 = scmp.ne.s32.totalorder %s111, %s113
      %p117 = scmp.eq.s32.totalorder %s14, 0
      %p118 = por %p116, %p117
      %p119 = scmp.ne.s32.totalorder %s111, %s113
      %p120 = scmp.eq.s32.totalorder %s19, 1
      %p121 = por %p119, %p120
      %p122 = scmp.ne.s32.totalorder %s113, %s114
      %p123 = scmp.eq.s32.totalorder %s19, 0
      %p124 = por %p122, %p123
      %p125 = scmp.ne.s32.totalorder %s113, %s114
      %p126 = scmp.eq.s32.totalorder %s20, 1
      %p127 = por %p125, %p126
      %p129 = scmp.ne.s32.totalorder %s114, %s128
      %p130 = scmp.eq.s32.totalorder %s20, 0
      %p131 = por %p129, %p130
      %s132 = ssub.s32 %s14, %s21
      %p133 = scmp.eq.s32.totalorder %s132, 0
      %s135 = sadd.s32 %s134, 1
      %s136 = scalar_select %p133, %s134, %s135
      %p139 = pneg %p133
      %p140 = scmp.eq.s32.totalorder %s14, 1
      %p141 = por %p139, %p140
      %p142 = scmp.ne.s32.totalorder %s134, %s137
      %p143 = scmp.eq.s32.totalorder %s14, 0
      %p144 = por %p142, %p143
      %p145 = scmp.ne.s32.totalorder %s134, %s137
      %p146 = scmp.eq.s32.totalorder %s19, 1
      %p147 = por %p145, %p146
      %p148 = scmp.ne.s32.totalorder %s137, %s138
      %p149 = scmp.eq.s32.totalorder %s19, 0
      %p150 = por %p148, %p149
      %p151 = scmp.ne.s32.totalorder %s137, %s138
      %p152 = scmp.eq.s32.totalorder %s20, 1
      %p153 = por %p151, %p152
      %p155 = scmp.ne.s32.totalorder %s138, %s154
      %p156 = scmp.eq.s32.totalorder %s20, 0
      %p157 = por %p155, %p156
      %p158 = scmp.le.s32.totalorder 1, %s14
      %p159 = scmp.lt.s32.totalorder %s14, 3
      %p160 = pnand %p158, %p159
      %p161 = pneg %p160
      // Predicated region
      $region9: #{tpu_custom_call.1} parent=5 // pred_check
        _
      $region10: #{tpu_custom_call.1} parent=5 // pred_check_branch
        %163 = sbr.rel (%p160) target = $region12
      $region11: #{tpu_custom_call.1} parent=5 // pred_region
        %s164 = ssub.s32 %s14, 1
        // Predicated region
        $region13: #{tpu_custom_call.1} parent=11 // pred_check
          %p165 = pneg %p61
        $region14: #{tpu_custom_call.1} parent=11 // pred_check_branch
          %167 = sbr.rel (%p165) target = $region16
        $region15: #{tpu_custom_call.1} parent=11 // pred_region
          _
        $region16: #{tpu_custom_call.1} parent=11 // pred_fallthru
          _
        // Predicated region
        $region17: #{tpu_custom_call.1} parent=11 // pred_check
          %p168 = pneg %p82
        $region18: #{tpu_custom_call.1} parent=11 // pred_check_branch
          %170 = sbr.rel (%p168) target = $region20
        $region19: #{tpu_custom_call.1} parent=11 // pred_region
          _
        $region20: #{tpu_custom_call.1} parent=11 // pred_fallthru
          _
        // Predicated region
        $region21: #{tpu_custom_call.1} parent=11 // pred_check
          %p171 = pneg %p103
        $region22: #{tpu_custom_call.1} parent=11 // pred_check_branch
          %173 = sbr.rel (%p171) target = $region24
        $region23: #{tpu_custom_call.1} parent=11 // pred_region
          _
        $region24: #{tpu_custom_call.1} parent=11 // pred_fallthru
          _
        // Predicated region
        $region25: #{tpu_custom_call.1} parent=11 // pred_check
          %p174 = pneg %p124
        $region26: #{tpu_custom_call.1} parent=11 // pred_check_branch
          %176 = sbr.rel (%p174) target = $region28
        $region27: #{tpu_custom_call.1} parent=11 // pred_region
          _
        $region28: #{tpu_custom_call.1} parent=11 // pred_fallthru
          _
      $region12: #{tpu_custom_call.1} parent=5 // pred_fallthru
        _
      %p177 = scmp.lt.s32.totalorder %s14, 2
      // Predicated region
      $region29: #{tpu_custom_call.1} parent=5 // pred_check
        %p178 = pneg %p177
      $region30: #{tpu_custom_call.1} parent=5 // pred_check_branch
        %180 = sbr.rel (%p178) target = $region32
      $region31: #{tpu_custom_call.1} parent=5 // pred_region
        // Predicated region
        $region33: #{tpu_custom_call.1} parent=31 // pred_check
          %p181 = pneg %p34
        $region34: #{tpu_custom_call.1} parent=31 // pred_check_branch
          %183 = sbr.rel (%p181) target = $region36
        $region35: #{tpu_custom_call.1} parent=31 // pred_region
          %p184 = scmp.lt.s32.totalorder %s14, 1
          %s185 = scalar_select %p184, %s14, 1
          %s186 = smul.addr %s185, 8
          %s187 = scalar_lea.vmem %s0, %s186
        $region36: #{tpu_custom_call.1} parent=31 // pred_fallthru
          _
      $region32: #{tpu_custom_call.1} parent=5 // pred_fallthru
        _
      %p188 = scmp.le.s32.totalorder 1, %s14
      %p189 = scmp.lt.s32.totalorder %s14, 3
      %p190 = pnand %p188, %p189
      %p191 = pneg %p190
      // Predicated region
      $region37: #{tpu_custom_call.1} parent=5 // pred_check
        _
      $region38: #{tpu_custom_call.1} parent=5 // pred_check_branch
        %193 = sbr.rel (%p190) target = $region40
      $region39: #{tpu_custom_call.1} parent=5 // pred_region
        %s194 = ssub.s32 %s14, 1
        %p195 = scmp.lt.s32.totalorder %s19, 1
        %s196 = scalar_select %p195, %s19, 1
        %s197 = smul.addr %s196, 8
        %s198 = scalar_lea.vmem %s0, %s197
        %p199 = pneg %p40
        %p200 = pneg %p37
        %p201 = pneg %p61
        %p202 = pneg %p58
        %p203 = pneg %p82
        %p204 = pneg %p79
        %p205 = pneg %p103
        %p206 = pneg %p100
        %p207 = pneg %p124
        %p208 = pneg %p121
        %p209 = pneg %p150
        %p210 = pneg %p147
        %s211 = sand.u32 %s137, 1
        %s212 = scalar_lea.sflag [#allocation3], %s211
        %s213 = sand.u32 %s137, 1
        %s214 = smul.addr %s213, 8
        %s215 = scalar_lea.vmem [#allocation2], %s214
        %p216 = scmp.lt.s32.totalorder %s19, 1
        %s217 = scalar_select %p216, %s19, 1
        %s218 = smul.addr %s217, 8
        %s219 = scalar_lea.vmem %s0, %s218
        %v220 = vld [vmem:[%s219] sm:$0xff]
        %v221 = vld [vmem:[%s1] sm:$0xff]
        %v222 = vld [vmem:[%s1 + $0x8] sm:$0xff]
        %v223 = vld [vmem:[%s1 + $0x10] sm:$0xff]
        %v224 = vld [vmem:[%s1 + $0x18] sm:$0xff]
        %v225 = vld [vmem:[%s2] sm:$0x1]
        %v227 = vperm.slane %v225, 0
        %vm229 = vcmask 261120
        %v231 = vsel %vm229, %v220, 0
        %233 = vmatpush.msra.mxu0 0.0
        %234 = vmatpush.msra.mxu0 0.0
        %235 = vmatpush.msra.mxu0 0.0
        %236 = vmatpush.msra.mxu0 0.0
        %237 = vmatpush.msra.mxu0 0.0
        %238 = vmatpush.msra.mxu0 0.0
        %239 = vmatpush.msra.mxu0 0.0
        %240 = vmatpush.msra.mxu0 0.0
        %241 = vmatpush.msra.mxu0 0.0
        %242 = vmatpush.msra.mxu0 0.0
        %243 = vmatpush.msra.mxu0 0.0
        %244 = vmatpush.msra.mxu0 0.0
        %245 = vmatpush.msra.mxu0 %v224
        %246 = vmatpush.msra.mxu0 %v223
        %247 = vmatpush.msra.mxu0 %v222
        %248 = vmatpush.msra.mxu0 %v221
        %249 = vmatmul.f32.gmra.mxu0 %v231
        %v250 = vpop.f32.mrf.mxu0
        %v251 = vadd.f32 %v227, %v250
        %252 = vdwg.mxu0
        %v253 = vmax.f32 %v251, 0.0
        %v254 = vld [vmem:[%s3] sm:$0xff]
        %v255 = vld [vmem:[%s3 + $0x8] sm:$0xff]
        %v256 = vld [vmem:[%s3 + $0x10] sm:$0xff]
        %v257 = vld [vmem:[%s3 + $0x18] sm:$0xff]
        %v258 = vld [vmem:[%s3 + $0x20] sm:$0xff]
        %v259 = vld [vmem:[%s3 + $0x28] sm:$0xff]
        %v260 = vld [vmem:[%s3 + $0x30] sm:$0xff]
        %v261 = vld [vmem:[%s3 + $0x38] sm:$0xff]
        %v262 = vld [vmem:[%s3 + $0x40] sm:$0xff]
        %v263 = vld [vmem:[%s3 + $0x48] sm:$0xff]
        %v264 = vld [vmem:[%s3 + $0x50] sm:$0xff]
        %v265 = vld [vmem:[%s3 + $0x58] sm:$0xff]
        %v266 = vld [vmem:[%s3 + $0x60] sm:$0xff]
        %v267 = vld [vmem:[%s3 + $0x68] sm:$0xff]
        %v268 = vld [vmem:[%s3 + $0x70] sm:$0xff]
        %v269 = vld [vmem:[%s3 + $0x78] sm:$0xff]
        %v270 = vld [vmem:[%s4] sm:$0x1]
        %v272 = vperm.slane %v270, 0
        %274 = vmatpush.msra.mxu0 %v269
        %275 = vmatpush.msra.mxu0 %v268
        %276 = vmatpush.msra.mxu0 %v267
        %277 = vmatpush.msra.mxu0 %v266
        %278 = vmatpush.msra.mxu0 %v265
        %279 = vmatpush.msra.mxu0 %v264
        %280 = vmatpush.msra.mxu0 %v263
        %281 = vmatpush.msra.mxu0 %v262
        %282 = vmatpush.msra.mxu0 %v261
        %283 = vmatpush.msra.mxu0 %v260
        %284 = vmatpush.msra.mxu0 %v259
        %285 = vmatpush.msra.mxu0 %v258
        %286 = vmatpush.msra.mxu0 %v257
        %287 = vmatpush.msra.mxu0 %v256
        %288 = vmatpush.msra.mxu0 %v255
        %289 = vmatpush.msra.mxu0 %v254
        %290 = vmatmul.f32.gmra.mxu0 %v253
        %v291 = vpop.f32.mrf.mxu0
        %v292 = vadd.f32 %v272, %v291
        %293 = vdwg.mxu0
        %v294 = vmul.f32 %v292, %v292
        %vm295 = vcmask 130048
        %v296 = vsel %vm295, %v294, 0.0
        %297 = vadd.xlane.f32.xlu0 %v296
        %v298 = vpop.xlane.xlu0 %297
        %v299 = vrsqrt.pop %v298
        %v300 = vmul.f32 %v299, %v298
        %v301 = vmul.f32 %v300, %v299
        %v302 = vmul.f32 0.5, %v301
        %v303 = vsub.f32 1.5, %v302
        %v304 = vmul.f32 %v299, %v303
        %vm305 = vweird.f32 %v298
        %vm306 = vweird.f32 %v299
        %vm307 = vmor %vm305, %vm306
        %v308 = vsel %vm307, %v299, %v304
        %v309 = vmul.f32 %v292, %v308
        %vm310 = vweird.f32 %v309
        %vm311 = vmxor %vm310, 1
        %v312 = vsel %vm311, %v309, 0.0
        %313 = vst.msk [vmem:[%s215] sm:$0xff] %vm295, %v312
        %s314 = sand.u32 %s137, 1
        %s315 = scalar_lea.sflag [#allocation3], %s314
        %s316 = sand.u32 %s137, 1
        %s317 = smul.addr %s316, 8
        %s318 = scalar_lea.vmem [#allocation2], %s317
        // Predicated region
        $region41: #{tpu_custom_call.1} parent=39 // pred_check
          %p319 = pneg %p147
        $region42: #{tpu_custom_call.1} parent=39 // pred_check_branch
          %321 = sbr.rel (%p319) target = $region44
        $region43: #{tpu_custom_call.1} parent=39 // pred_region
          %323 = vsyncadd %s315, 0
          %s324 = smul.addr %s19, 8
          %s325 = scalar_lea.hbm %s5, %s324
          %s327 = sshll.u32 %s318, 4
          %s328 = int_to_ptr.vmem [resolvable:$true] %s327
          %s329 = sshll.u32 %s325, 4
          %s330 = int_to_ptr.hbm [resolvable:$true] %s329
          %332 = dma.vmem_to_hbm [thread:$0]  %s328, 128, %s330, %s315
        $region44: #{tpu_custom_call.1} parent=39 // pred_fallthru
          _
      $region40: #{tpu_custom_call.1} parent=5 // pred_fallthru
        _
      %p333 = scmp.le.s32.totalorder 2, %s14
      // Predicated region
      $region45: #{tpu_custom_call.1} parent=5 // pred_check
        %p334 = pneg %p333
      $region46: #{tpu_custom_call.1} parent=5 // pred_check_branch
        %336 = sbr.rel (%p334) target = $region48
      $region47: #{tpu_custom_call.1} parent=5 // pred_region
        %s337 = ssub.s32 %s14, 2
        // Predicated region
        $region49: #{tpu_custom_call.1} parent=47 // pred_check
          %p338 = pneg %p153
        $region50: #{tpu_custom_call.1} parent=47 // pred_check_branch
          %340 = sbr.rel (%p338) target = $region52
        $region51: #{tpu_custom_call.1} parent=47 // pred_region
          %s341 = sand.u32 %s138, 1
          %s342 = scalar_lea.sflag [#allocation3], %s341
          %s343 = sand.u32 %s138, 1
          %s344 = smul.addr %s343, 8
          %s345 = scalar_lea.vmem [#allocation2], %s344
          %347 = dma.done %s342, 128
        $region52: #{tpu_custom_call.1} parent=47 // pred_fallthru
          _
      $region48: #{tpu_custom_call.1} parent=5 // pred_fallthru
        _
    $region6: #{tpu_custom_call.1} parent=1 // loop_footer
      %s18 = sadd.s32 1, %s14
    $region7: #{tpu_custom_call.1} parent=1 // loop_footer_branch
      %13 = sbr.rel target = $region3
    $region8: #{tpu_custom_call.1} parent=1 // loop_exit
      _
    %348 = vsyncpa [#allocation3], 1
    %s349 = scalar_lea.sflag [#allocation3], 1
    %350 = vsyncpa %s349, 1

// kernel: tpu_custom_call.1
$region0: #{tpu_custom_call.1}
  #allocation0 [shape = 'u32[]', space=smem, size = 0x4, offset = 0x4, fixed_abs, tag = 'smem constant byte address 0x4 - core index']
  #allocation1 [shape = 'u32[72,128]{1,0:T(1,128)}', space=vmem, size = 0x9000, scoped, tag = 'internal scratch']
  %s0 = inlined_call_operand.vmem [shape: f32[16,32], index: 0, kind: input, shape index: {}]
  %s1 = inlined_call_operand.vmem [shape: f32[32,128], index: 1, kind: input, shape index: {}]
  %s2 = inlined_call_operand.vmem [shape: f32[1,128], index: 2, kind: input, shape index: {}]
  %s3 = inlined_call_operand.vmem [shape: f32[128,16], index: 3, kind: input, shape index: {}]
  %s4 = inlined_call_operand.vmem [shape: f32[1,16], index: 4, kind: input, shape index: {}]
  %s5 = inlined_call_operand.hbm [shape: f32[16,16], index: 5, kind: output, shape index: {}]
  %s6 = sld [smem:[#allocation0]]
  $region53: #{tpu_custom_call.1} parent=0
    _
  %s8 = ssub.s32 1, %s6
  %s9 = scalar_select 0, %s8, %s6
  $region1: #{tpu_custom_call.1} parent=0
    #allocation2 [shape = 'u8[8192]{0}', space=vmem, size = 0x2000, scoped, tag = 'output window, operand 0']
    #allocation3 [shape = 's32[2]{0}', space=sflag, size = 0x8, scoped, tag = 'scoped memory for tpu_custom_call.1']
    %10 = vsyncpa [#allocation3], 0
    %s11 = scalar_lea.sflag [#allocation3], 1
    %12 = vsyncpa %s11, 0
    loop: start=0, step=1, limit=4
    $region2: #{tpu_custom_call.1} parent=1 // loop_pre_header
      _
    $region3: #{tpu_custom_call.1} parent=1 // loop_header
      %s14 = sphi 0, %s18
      %p15 = scmp.ge.s32.totalorder %s14, 4
      %s24 = sphi 0, %s26
      %s27 = sphi 0, %s24
      %s28 = sphi 0, %s27
      %s44 = sphi 0, %s28
      %s48 = sphi 0, %s48
      %s50 = sphi 0, %s48
      %s51 = sphi 0, %s50
      %s65 = sphi 0, %s51
      %s69 = sphi 0, %s69
      %s71 = sphi 0, %s69
      %s72 = sphi 0, %s71
      %s86 = sphi 0, %s72
      %s90 = sphi 0, %s90
      %s92 = sphi 0, %s90
      %s93 = sphi 0, %s92
      %s107 = sphi 0, %s93
      %s111 = sphi 0, %s111
      %s113 = sphi 0, %s111
      %s114 = sphi 0, %s113
      %s128 = sphi 0, %s114
      %s134 = sphi 0, %s136
      %s137 = sphi 0, %s134
      %s138 = sphi 0, %s137
      %s154 = sphi 0, %s138
    $region4: #{tpu_custom_call.1} parent=1 // loop_header_branch
      %17 = sbr.rel (%p15) target = $region8
    $region5: #{tpu_custom_call.1} parent=1 // loop_body
      %s19 = ssub.s32 %s14, 1
      %s20 = ssub.s32 %s14, 2
      %s21 = sadd.s32 %s14, 1
      %s22 = ssub.s32 %s14, %s21
      %p23 = scmp.eq.s32.totalorder %s22, 0
      %s25 = sadd.s32 %s24, 1
      %s26 = scalar_select %p23, %s24, %s25
      %p29 = pneg %p23
      %p30 = scmp.eq.s32.totalorder %s14, 1
      %p31 = por %p29, %p30
      %p32 = scmp.ne.s32.totalorder %s24, %s27
      %p33 = scmp.eq.s32.totalorder %s14, 0
      %p34 = por %p32, %p33
      %p35 = scmp.ne.s32.totalorder %s24, %s27
      %p36 = scmp.eq.s32.totalorder %s19, 1
      %p37 = por %p35, %p36
      %p38 = scmp.ne.s32.totalorder %s27, %s28
      %p39 = scmp.eq.s32.totalorder %s19, 0
      %p40 = por %p38, %p39
      %p41 = scmp.ne.s32.totalorder %s27, %s28
      %p42 = scmp.eq.s32.totalorder %s20, 1
      %p43 = por %p41, %p42
      %p45 = scmp.ne.s32.totalorder %s28, %s44
      %p46 = scmp.eq.s32.totalorder %s20, 0
      %p47 = por %p45, %p46
      %s49 = sadd.s32 %s48, 1
      %p52 = scmp.eq.s32.totalorder %s14, 1
      %p53 = scmp.ne.s32.totalorder %s48, %s50
      %p54 = scmp.eq.s32.totalorder %s14, 0
      %p55 = por %p53, %p54
      %p56 = scmp.ne.s32.totalorder %s48, %s50
      %p57 = scmp.eq.s32.totalorder %s19, 1
      %p58 = por %p56, %p57
      %p59 = scmp.ne.s32.totalorder %s50, %s51
      %p60 = scmp.eq.s32.totalorder %s19, 0
      %p61 = por %p59, %p60
      %p62 = scmp.ne.s32.totalorder %s50, %s51
      %p63 = scmp.eq.s32.totalorder %s20, 1
      %p64 = por %p62, %p63
      %p66 = scmp.ne.s32.totalorder %s51, %s65
      %p67 = scmp.eq.s32.totalorder %s20, 0
      %p68 = por %p66, %p67
      %s70 = sadd.s32 %s69, 1
      %p73 = scmp.eq.s32.totalorder %s14, 1
      %p74 = scmp.ne.s32.totalorder %s69, %s71
      %p75 = scmp.eq.s32.totalorder %s14, 0
      %p76 = por %p74, %p75
      %p77 = scmp.ne.s32.totalorder %s69, %s71
      %p78 = scmp.eq.s32.totalorder %s19, 1
      %p79 = por %p77, %p78
      %p80 = scmp.ne.s32.totalorder %s71, %s72
      %p81 = scmp.eq.s32.totalorder %s19, 0
      %p82 = por %p80, %p81
      %p83 = scmp.ne.s32.totalorder %s71, %s72
      %p84 = scmp.eq.s32.totalorder %s20, 1
      %p85 = por %p83, %p84
      %p87 = scmp.ne.s32.totalorder %s72, %s86
      %p88 = scmp.eq.s32.totalorder %s20, 0
      %p89 = por %p87, %p88
      %s91 = sadd.s32 %s90, 1
      %p94 = scmp.eq.s32.totalorder %s14, 1
      %p95 = scmp.ne.s32.totalorder %s90, %s92
      %p96 = scmp.eq.s32.totalorder %s14, 0
      %p97 = por %p95, %p96
      %p98 = scmp.ne.s32.totalorder %s90, %s92
      %p99 = scmp.eq.s32.totalorder %s19, 1
      %p100 = por %p98, %p99
      %p101 = scmp.ne.s32.totalorder %s92, %s93
      %p102 = scmp.eq.s32.totalorder %s19, 0
      %p103 = por %p101, %p102
      %p104 = scmp.ne.s32.totalorder %s92, %s93
      %p105 = scmp.eq.s32.totalorder %s20, 1
      %p106 = por %p104, %p105
      %p108 = scmp.ne.s32.totalorder %s93, %s107
      %p109 = scmp.eq.s32.totalorder %s20, 0
      %p110 = por %p108, %p109
      %s112 = sadd.s32 %s111, 1
      %p115 = scmp.eq.s32.totalorder %s14, 1
      %p116 = scmp.ne.s32.totalorder %s111, %s113
      %p117 = scmp.eq.s32.totalorder %s14, 0
      %p118 = por %p116, %p117
      %p119 = scmp.ne.s32.totalorder %s111, %s113
      %p120 = scmp.eq.s32.totalorder %s19, 1
      %p121 = por %p119, %p120
      %p122 = scmp.ne.s32.totalorder %s113, %s114
      %p123 = scmp.eq.s32.totalorder %s19, 0
      %p124 = por %p122, %p123
      %p125 = scmp.ne.s32.totalorder %s113, %s114
      %p126 = scmp.eq.s32.totalorder %s20, 1
      %p127 = por %p125, %p126
      %p129 = scmp.ne.s32.totalorder %s114, %s128
      %p130 = scmp.eq.s32.totalorder %s20, 0
      %p131 = por %p129, %p130
      %s132 = ssub.s32 %s14, %s21
      %p133 = scmp.eq.s32.totalorder %s132, 0
      %s135 = sadd.s32 %s134, 1
      %s136 = scalar_select %p133, %s134, %s135
      %p139 = pneg %p133
      %p140 = scmp.eq.s32.totalorder %s14, 1
      %p141 = por %p139, %p140
      %p142 = scmp.ne.s32.totalorder %s134, %s137
      %p143 = scmp.eq.s32.totalorder %s14, 0
      %p144 = por %p142, %p143
      %p145 = scmp.ne.s32.totalorder %s134, %s137
      %p146 = scmp.eq.s32.totalorder %s19, 1
      %p147 = por %p145, %p146
      %p148 = scmp.ne.s32.totalorder %s137, %s138
      %p149 = scmp.eq.s32.totalorder %s19, 0
      %p150 = por %p148, %p149
      %p151 = scmp.ne.s32.totalorder %s137, %s138
      %p152 = scmp.eq.s32.totalorder %s20, 1
      %p153 = por %p151, %p152
      %p155 = scmp.ne.s32.totalorder %s138, %s154
      %p156 = scmp.eq.s32.totalorder %s20, 0
      %p157 = por %p155, %p156
      %p158 = scmp.le.s32.totalorder 1, %s14
      %p159 = scmp.lt.s32.totalorder %s14, 3
      %p160 = pnand %p158, %p159
      %p161 = pneg %p160
      // Predicated region
      $region9: #{tpu_custom_call.1} parent=5 // pred_check
        _
      $region10: #{tpu_custom_call.1} parent=5 // pred_check_branch
        %163 = sbr.rel (%p160) target = $region12
      $region11: #{tpu_custom_call.1} parent=5 // pred_region
        %s164 = ssub.s32 %s14, 1
        // Predicated region
        $region13: #{tpu_custom_call.1} parent=11 // pred_check
          %p165 = pneg %p61
        $region14: #{tpu_custom_call.1} parent=11 // pred_check_branch
          %167 = sbr.rel (%p165) target = $region16
        $region15: #{tpu_custom_call.1} parent=11 // pred_region
          _
        $region16: #{tpu_custom_call.1} parent=11 // pred_fallthru
          _
        // Predicated region
        $region17: #{tpu_custom_call.1} parent=11 // pred_check
          %p168 = pneg %p82
        $region18: #{tpu_custom_call.1} parent=11 // pred_check_branch
          %170 = sbr.rel (%p168) target = $region20
        $region19: #{tpu_custom_call.1} parent=11 // pred_region
          _
        $region20: #{tpu_custom_call.1} parent=11 // pred_fallthru
          _
        // Predicated region
        $region21: #{tpu_custom_call.1} parent=11 // pred_check
          %p171 = pneg %p103
        $region22: #{tpu_custom_call.1} parent=11 // pred_check_branch
          %173 = sbr.rel (%p171) target = $region24
        $region23: #{tpu_custom_call.1} parent=11 // pred_region
          _
        $region24: #{tpu_custom_call.1} parent=11 // pred_fallthru
          _
        // Predicated region
        $region25: #{tpu_custom_call.1} parent=11 // pred_check
          %p174 = pneg %p124
        $region26: #{tpu_custom_call.1} parent=11 // pred_check_branch
          %176 = sbr.rel (%p174) target = $region28
        $region27: #{tpu_custom_call.1} parent=11 // pred_region
          _
        $region28: #{tpu_custom_call.1} parent=11 // pred_fallthru
          _
      $region12: #{tpu_custom_call.1} parent=5 // pred_fallthru
        _
      %p177 = scmp.lt.s32.totalorder %s14, 2
      // Predicated region
      $region29: #{tpu_custom_call.1} parent=5 // pred_check
        %p178 = pneg %p177
      $region30: #{tpu_custom_call.1} parent=5 // pred_check_branch
        %180 = sbr.rel (%p178) target = $region32
      $region31: #{tpu_custom_call.1} parent=5 // pred_region
        // Predicated region
        $region33: #{tpu_custom_call.1} parent=31 // pred_check
          %p181 = pneg %p34
        $region34: #{tpu_custom_call.1} parent=31 // pred_check_branch
          %183 = sbr.rel (%p181) target = $region36
        $region35: #{tpu_custom_call.1} parent=31 // pred_region
          %p184 = scmp.lt.s32.totalorder %s14, 1
          %s185 = scalar_select %p184, %s14, 1
          %s186 = smul.addr %s185, 8
          %s187 = scalar_lea.vmem %s0, %s186
        $region36: #{tpu_custom_call.1} parent=31 // pred_fallthru
          _
      $region32: #{tpu_custom_call.1} parent=5 // pred_fallthru
        _
      %p188 = scmp.le.s32.totalorder 1, %s14
      %p189 = scmp.lt.s32.totalorder %s14, 3
      %p190 = pnand %p188, %p189
      %p191 = pneg %p190
      // Predicated region
      $region37: #{tpu_custom_call.1} parent=5 // pred_check
        _
      $region38: #{tpu_custom_call.1} parent=5 // pred_check_branch
        %193 = sbr.rel (%p190) target = $region40
      $region39: #{tpu_custom_call.1} parent=5 // pred_region
        %s194 = ssub.s32 %s14, 1
        %p195 = scmp.lt.s32.totalorder %s19, 1
        %s196 = scalar_select %p195, %s19, 1
        %s197 = smul.addr %s196, 8
        %s198 = scalar_lea.vmem %s0, %s197
        %p199 = pneg %p40
        %p200 = pneg %p37
        %p201 = pneg %p61
        %p202 = pneg %p58
        %p203 = pneg %p82
        %p204 = pneg %p79
        %p205 = pneg %p103
        %p206 = pneg %p100
        %p207 = pneg %p124
        %p208 = pneg %p121
        %p209 = pneg %p150
        %p210 = pneg %p147
        %s211 = sand.u32 %s137, 1
        %s212 = scalar_lea.sflag [#allocation3], %s211
        %s213 = sand.u32 %s137, 1
        %s214 = smul.addr %s213, 8
        %s215 = scalar_lea.vmem [#allocation2], %s214
        %p216 = scmp.lt.s32.totalorder %s19, 1
        %s217 = scalar_select %p216, %s19, 1
        %s218 = smul.addr %s217, 8
        %s219 = scalar_lea.vmem %s0, %s218
        %v220 = vld [vmem:[%s219] sm:$0xff]
        %v221 = vld [vmem:[%s1] sm:$0xff]
        %v222 = vld [vmem:[%s1 + $0x8] sm:$0xff]
        %v223 = vld [vmem:[%s1 + $0x10] sm:$0xff]
        %v224 = vld [vmem:[%s1 + $0x18] sm:$0xff]
        %v225 = vld [vmem:[%s2] sm:$0x1]
        %v227 = vperm.slane %v225, 0
        %vm229 = vcmask 261120
        %v231 = vsel %vm229, %v220, 0
        %233 = vmatpush.msra.mxu0 0.0
        %234 = vmatpush.msra.mxu0 0.0
        %235 = vmatpush.msra.mxu0 0.0
        %236 = vmatpush.msra.mxu0 0.0
        %237 = vmatpush.msra.mxu0 0.0
        %238 = vmatpush.msra.mxu0 0.0
        %239 = vmatpush.msra.mxu0 0.0
        %240 = vmatpush.msra.mxu0 0.0
        %241 = vmatpush.msra.mxu0 0.0
        %242 = vmatpush.msra.mxu0 0.0
        %243 = vmatpush.msra.mxu0 0.0
        %244 = vmatpush.msra.mxu0 0.0
        %245 = vmatpush.msra.mxu0 %v224
        %246 = vmatpush.msra.mxu0 %v223
        %247 = vmatpush.msra.mxu0 %v222
        %248 = vmatpush.msra.mxu0 %v221
        %249 = vmatmul.f32.gmra.mxu0 %v231
        %v250 = vpop.f32.mrf.mxu0
        %v251 = vadd.f32 %v227, %v250
        %252 = vdwg.mxu0
        %v253 = vmax.f32 %v251, 0.0
        %v254 = vld [vmem:[%s3] sm:$0xff]
        %v255 = vld [vmem:[%s3 + $0x8] sm:$0xff]
        %v256 = vld [vmem:[%s3 + $0x10] sm:$0xff]
        %v257 = vld [vmem:[%s3 + $0x18] sm:$0xff]
        %v258 = vld [vmem:[%s3 + $0x20] sm:$0xff]
        %v259 = vld [vmem:[%s3 + $0x28] sm:$0xff]
        %v260 = vld [vmem:[%s3 + $0x30] sm:$0xff]
        %v261 = vld [vmem:[%s3 + $0x38] sm:$0xff]
        %v262 = vld [vmem:[%s3 + $0x40] sm:$0xff]
        %v263 = vld [vmem:[%s3 + $0x48] sm:$0xff]
        %v264 = vld [vmem:[%s3 + $0x50] sm:$0xff]
        %v265 = vld [vmem:[%s3 + $0x58] sm:$0xff]
        %v266 = vld [vmem:[%s3 + $0x60] sm:$0xff]
        %v267 = vld [vmem:[%s3 + $0x68] sm:$0xff]
        %v268 = vld [vmem:[%s3 + $0x70] sm:$0xff]
        %v269 = vld [vmem:[%s3 + $0x78] sm:$0xff]
        %v270 = vld [vmem:[%s4] sm:$0x1]
        %v272 = vperm.slane %v270, 0
        %274 = vmatpush.msra.mxu0 %v269
        %275 = vmatpush.msra.mxu0 %v268
        %276 = vmatpush.msra.mxu0 %v267
        %277 = vmatpush.msra.mxu0 %v266
        %278 = vmatpush.msra.mxu0 %v265
        %279 = vmatpush.msra.mxu0 %v264
        %280 = vmatpush.msra.mxu0 %v263
        %281 = vmatpush.msra.mxu0 %v262
        %282 = vmatpush.msra.mxu0 %v261
        %283 = vmatpush.msra.mxu0 %v260
        %284 = vmatpush.msra.mxu0 %v259
        %285 = vmatpush.msra.mxu0 %v258
        %286 = vmatpush.msra.mxu0 %v257
        %287 = vmatpush.msra.mxu0 %v256
        %288 = vmatpush.msra.mxu0 %v255
        %289 = vmatpush.msra.mxu0 %v254
        %290 = vmatmul.f32.gmra.mxu0 %v253
        %v291 = vpop.f32.mrf.mxu0
        %v292 = vadd.f32 %v272, %v291
        %293 = vdwg.mxu0
        %v294 = vmul.f32 %v292, %v292
        %vm295 = vcmask 130048
        %v296 = vsel %vm295, %v294, 0.0
        %297 = vadd.xlane.f32.xlu0 %v296
        %v298 = vpop.xlane.xlu0 %297
        %v299 = vrsqrt.pop %v298
        %v300 = vmul.f32 %v299, %v298
        %v301 = vmul.f32 %v300, %v299
        %v302 = vmul.f32 0.5, %v301
        %v303 = vsub.f32 1.5, %v302
        %v304 = vmul.f32 %v299, %v303
        %vm305 = vweird.f32 %v298
        %vm306 = vweird.f32 %v299
        %vm307 = vmor %vm305, %vm306
        %v308 = vsel %vm307, %v299, %v304
        %v309 = vmul.f32 %v292, %v308
        %vm310 = vweird.f32 %v309
        %vm311 = vmxor %vm310, 1
        %v312 = vsel %vm311, %v309, 0.0
        %313 = vst.msk [vmem:[%s215] sm:$0xff] %vm295, %v312
        %s314 = sand.u32 %s137, 1
        %s315 = scalar_lea.sflag [#allocation3], %s314
        %s316 = sand.u32 %s137, 1
        %s317 = smul.addr %s316, 8
        %s318 = scalar_lea.vmem [#allocation2], %s317
        // Predicated region
        $region41: #{tpu_custom_call.1} parent=39 // pred_check
          %p319 = pneg %p147
        $region42: #{tpu_custom_call.1} parent=39 // pred_check_branch
          %321 = sbr.rel (%p319) target = $region44
        $region43: #{tpu_custom_call.1} parent=39 // pred_region
          %323 = vsyncadd %s315, 0
          %s324 = smul.addr %s19, 8
          %s325 = scalar_lea.hbm %s5, %s324
          %s327 = sshll.u32 %s318, 4
          %s328 = int_to_ptr.vmem [resolvable:$true] %s327
          %s329 = sshll.u32 %s325, 4
          %s330 = int_to_ptr.hbm [resolvable:$true] %s329
          %332 = dma.vmem_to_hbm [thread:$0]  %s328, 128, %s330, %s315
        $region44: #{tpu_custom_call.1} parent=39 // pred_fallthru
          _
      $region40: #{tpu_custom_call.1} parent=5 // pred_fallthru
        _
      %p333 = scmp.le.s32.totalorder 2, %s14
      // Predicated region
      $region45: #{tpu_custom_call.1} parent=5 // pred_check
        %p334 = pneg %p333
      $region46: #{tpu_custom_call.1} parent=5 // pred_check_branch
        %336 = sbr.rel (%p334) target = $region48
      $region47: #{tpu_custom_call.1} parent=5 // pred_region
        %s337 = ssub.s32 %s14, 2
        // Predicated region
        $region49: #{tpu_custom_call.1} parent=47 // pred_check
          %p338 = pneg %p153
        $region50: #{tpu_custom_call.1} parent=47 // pred_check_branch
          %340 = sbr.rel (%p338) target = $region52
        $region51: #{tpu_custom_call.1} parent=47 // pred_region
          %s341 = sand.u32 %s138, 1
          %s342 = scalar_lea.sflag [#allocation3], %s341
          %s343 = sand.u32 %s138, 1
          %s344 = smul.addr %s343, 8
          %s345 = scalar_lea.vmem [#allocation2], %s344
          %347 = dma.done %s342, 128
        $region52: #{tpu_custom_call.1} parent=47 // pred_fallthru
          _
      $region48: #{tpu_custom_call.1} parent=5 // pred_fallthru
        _
    $region6: #{tpu_custom_call.1} parent=1 // loop_footer
      %s18 = sadd.s32 1, %s14
    $region7: #{tpu_custom_call.1} parent=1 // loop_footer_branch
      %13 = sbr.rel target = $region3
    $region8: #{tpu_custom_call.1} parent=1 // loop_exit
      _
    %348 = vsyncpa [#allocation3], 1
    %s349 = scalar_lea.sflag [#allocation3], 1
    %350 = vsyncpa %s349, 1

</llo_original>
